<compile_context>
chip_gen: v7x
topology: tpu7x:2x2x1
jax: 0.10.0
libtpu: 0.0.40
codegen_flags: <defaults>
</compile_context>

<pallas_src>
from functools import partial

import jax
import jax.numpy as jnp
from jax.experimental import pallas as pl
from jax.experimental.pallas import tpu as pltpu


def _conv_bn_act_kernel(x_ref, w_ref, shift_ref, o_ref, *, KH, leaky_slope):
    # x_ref:     (KH, M, K_pad)      pre-shifted, zero-padded, lane-dense LHS
    # w_ref:     (KH, K_pad, WC_out) band weights (BN scale folded, K zero-padded)
    # shift_ref: (1, WC_out)         folded BN shift, tiled over W
    # o_ref:     (M, WC_out)         lane-dense output tile
    acc = jnp.dot(x_ref[0], w_ref[0], preferred_element_type=jnp.float32)
    for kh in range(1, KH):                    # KH=3: contiguous accumulating pushes
        acc = acc + jnp.dot(x_ref[kh], w_ref[kh],
                            preferred_element_type=jnp.float32)
    y = acc + shift_ref[...]                   # BN shift (scale already in weights)
    y = jnp.maximum(y, leaky_slope * y)        # LeakyReLU, valid for 0 < slope < 1
    o_ref[...] = y.astype(o_ref.dtype)         # single full-width store


def fold_conv_bn_params(weight_oihw, gamma, beta, run_mean, run_var, *,
                        W_in, eps=1e-5, operand_dtype=jnp.float32):
    """Fold BN (inference) into the conv weights and build the lane-dense band
    matrix + shift row.  Call ONCE at parameter-load time (hoisted out of the
    per-call path per review)."""
    C_out, C_in, KH, KW = weight_oihw.shape
    pad = (KH - 1) // 2                        # matches PyTorch for odd kernel sizes
    W_out = W_in                               # stride=1 "same"
    Wp = W_in + 2 * pad
    WC_in, WC_out = Wp * C_in, W_out * C_out
    K_pad = ((WC_in + 127) // 128) * 128       # 72 -> 128: full contraction group

    f32 = jnp.float32
    w_hwio = jnp.transpose(weight_oihw, (2, 3, 1, 0)).astype(f32)  # (KH,KW,Cin,Cout)
    inv_std = 1.0 / jnp.sqrt(run_var.astype(f32) + eps)
    scale = gamma.astype(f32) * inv_std                            # (C_out,)
    shift = beta.astype(f32) - run_mean.astype(f32) * scale        # (C_out,)

    # Band weights: B[kh, w'*C_in + ci, w*C_out + co] = scale[co]*W[kh, w'-w, ci, co]
    # when 0 <= w'-w < KW, else 0, so out[n,h] = sum_kh x_rows[n,h+kh,:] @ B[kh] + shift.
    wp_idx = jnp.arange(Wp)
    w_idx = jnp.arange(W_out)
    kw_idx = wp_idx[:, None] - w_idx[None, :]                      # (Wp, W_out)
    valid = (kw_idx >= 0) & (kw_idx < KW)
    kw_safe = jnp.clip(kw_idx, 0, KW - 1)
    g = w_hwio[:, kw_safe]                                         # (KH,Wp,W_out,Cin,Cout)
    g = jnp.where(valid[None, :, :, None, None], g, 0.0)
    g = g * scale[None, None, None, None, :]                       # fold BN scale
    w_band = g.transpose(0, 1, 3, 2, 4).reshape(KH, WC_in, WC_out)
    w_band = jnp.pad(w_band, ((0, 0), (0, K_pad - WC_in), (0, 0)))  # zero K rows
    w_band = w_band.astype(operand_dtype)

    shift_tiled = jnp.tile(shift, (W_out,)).reshape(1, WC_out).astype(f32)
    return w_band, shift_tiled


def conv_bn_activation_folded(x_nchw, w_band, shift_tiled, *,
                              stride=1, leaky_slope=0.2, batch_block=None,
                              operand_dtype=jnp.float32):
    """Per-call path: layout packing + pallas_call.  Parameters must already be
    folded via fold_conv_bn_params."""
    assert stride == 1  # TODO(synk): stride > 1 not implemented in this kernel.
    N, C_in, H, W = x_nchw.shape
    KH, K_pad, WC_out = w_band.shape
    pad = (KH - 1) // 2
    H_out, W_out = H, W
    C_out = WC_out // W_out
    Hp = H + 2 * pad
    WC_in = (W + 2 * pad) * C_in
    assert K_pad >= WC_in

    # --- pack, pre-shift (aligned LHS), zero-pad K: plain JAX, ~KH x input bytes ---
    # TODO(synk): keep activations in this packed (H, W*C) layout across layers to
    # drop the per-call NCHW<->NHWC transposes entirely.
    x_nhwc = jnp.transpose(x_nchw, (0, 2, 3, 1))
    x_pad = jnp.pad(x_nhwc, ((0, 0), (pad, pad), (pad, pad), (0, 0)))
    x_packed = x_pad.reshape(N, Hp, WC_in)
    x_sh = jnp.stack([x_packed[:, kh:kh + H_out, :] for kh in range(KH)], axis=0)
    x_sh = x_sh.reshape(KH, N * H_out, WC_in)
    x_sh = jnp.pad(x_sh, ((0, 0), (0, 0), (0, K_pad - WC_in))).astype(operand_dtype)

    # Batch chunking: default = whole batch in one grid step (per-step overhead
    # dominates at this size); pass batch_block = N // 2 on v7x for a 2-TC split
    # once per-step compute exceeds ~0.35 us.
    NB = N if batch_block is None else batch_block
    assert N % NB == 0
    M_total = N * H_out
    M_blk = NB * H_out
    grid_steps = N // NB
    if grid_steps > 1:
        assert M_blk % 8 == 0

    if grid_steps > 1:
        # Grid-invariant blocks: single-buffer them (no point double-buffering).
        w_spec = pl.BlockSpec((KH, K_pad, WC_out), lambda i: (0, 0, 0),
                              pipeline_mode=pl.Buffered(1))
        s_spec = pl.BlockSpec((1, WC_out), lambda i: (0, 0),
                              pipeline_mode=pl.Buffered(1))
    else:
        w_spec = pl.BlockSpec((KH, K_pad, WC_out), lambda i: (0, 0, 0))
        s_spec = pl.BlockSpec((1, WC_out), lambda i: (0, 0))

    op_bytes = jnp.dtype(operand_dtype).itemsize
    out_bytes = jnp.dtype(x_nchw.dtype).itemsize
    cost = pl.CostEstimate(
        flops=2 * KH * M_total * K_pad * WC_out,
        transcendentals=0,
        bytes_accessed=(x_sh.size * op_bytes + w_band.size * op_bytes
                        + shift_tiled.size * 4 + M_total * WC_out * out_bytes),
    )

    out_packed = pl.pallas_call(
        partial(_conv_bn_act_kernel, KH=KH, leaky_slope=leaky_slope),
        out_shape=jax.ShapeDtypeStruct((M_total, WC_out), x_nchw.dtype),
        grid_spec=pltpu.PrefetchScalarGridSpec(
            num_scalar_prefetch=0,
            grid=(grid_steps,),
            in_specs=[
                pl.BlockSpec((KH, M_blk, K_pad), lambda i: (0, i, 0)),
                w_spec,
                s_spec,
            ],
            out_specs=pl.BlockSpec((M_blk, WC_out), lambda i: (i, 0)),
        ),
        compiler_params=pltpu.CompilerParams(
            dimension_semantics=("parallel",)),
        cost_estimate=cost,
        # VMEM footprint here is ~170 KiB; re-derive tiling (W-tiled band weights)
        # before scaling to large W/C, especially on v7x (64 MiB VMEM).
    )(x_sh, w_band, shift_tiled)

    out = out_packed.reshape(N, H_out, W_out, C_out)   # zero-cost unpack
    return jnp.transpose(out, (0, 3, 1, 2))            # back to NCHW


def conv_bn_activation(x_nchw, weight_oihw, gamma, beta, run_mean, run_var, *,
                       stride=1, eps=1e-5, leaky_slope=0.2, batch_block=None,
                       operand_dtype=jnp.float32):
    """Convenience path: folds params on every call.  For inference, prefer
    fold_conv_bn_params(...) once + conv_bn_activation_folded(...) per call."""
    w_band, shift_tiled = fold_conv_bn_params(
        weight_oihw, gamma, beta, run_mean, run_var,
        W_in=x_nchw.shape[3], eps=eps, operand_dtype=operand_dtype)
    return conv_bn_activation_folded(
        x_nchw, w_band, shift_tiled, stride=stride, leaky_slope=leaky_slope,
        batch_block=batch_block, operand_dtype=operand_dtype)


def _reference(x, w, gamma, beta, mean, var, eps=1e-5, slope=0.2):
    y = jax.lax.conv_general_dilated(
        x, w, window_strides=(1, 1), padding=((1, 1), (1, 1)),
        dimension_numbers=("NCHW", "OIHW", "NCHW"))
    c = lambda v: v[None, :, None, None]
    y = (y - c(mean)) / jnp.sqrt(c(var) + eps) * c(gamma) + c(beta)
    return jnp.where(y > 0, y, slope * y)


if __name__ == "__main__":
    key = jax.random.PRNGKey(0)
    k_x, k_w, k_g, k_b, k_m, k_v = jax.random.split(key, 6)

    N, C_in, H, W = 2, 4, 16, 16
    C_out, K = 8, 3

    x = jax.random.normal(k_x, (N, C_in, H, W), dtype=jnp.float32)
    weight = 0.1 * jax.random.normal(k_w, (C_out, C_in, K, K), dtype=jnp.float32)
    gamma = 1.0 + 0.1 * jax.random.normal(k_g, (C_out,), dtype=jnp.float32)
    beta = 0.1 * jax.random.normal(k_b, (C_out,), dtype=jnp.float32)
    run_mean = 0.1 * jax.random.normal(k_m, (C_out,), dtype=jnp.float32)
    run_var = jnp.abs(jax.random.normal(k_v, (C_out,), dtype=jnp.float32)) + 0.5

    # Hoisted parameter folding (once), then the per-call kernel path.
    w_band, shift_tiled = fold_conv_bn_params(
        weight, gamma, beta, run_mean, run_var, W_in=W)
    out = conv_bn_activation_folded(x, w_band, shift_tiled)
    out = jax.block_until_ready(out)

    ref = _reference(x, weight, gamma, beta, run_mean, run_var)
    assert out.shape == (N, C_out, H, W)
    assert jnp.allclose(out, ref, atol=1e-4, rtol=1e-4), "mismatch vs reference"

    print("KERNEL_OK")
</pallas_src>

<mosaic_0001>
module attributes {stable_mosaic.version = 11 : i64} {
  func.func @_conv_bn_act_kernel(%arg0: i32, %arg1: memref<3x32x128xf32, #tpu.memory_space<vmem>>, %arg2: memref<3x128x128xf32, #tpu.memory_space<vmem>>, %arg3: memref<1x128xf32, #tpu.memory_space<vmem>>, %arg4: memref<32x128xf32, #tpu.memory_space<vmem>>) attributes {dimension_semantics = [#tpu.dimension_semantics<parallel>], iteration_bounds = array<i64: 1>, scalar_prefetch = 0 : i64, scratch_operands = 0 : i64, tpu.core_type = #tpu.core_type<tc>, window_params = [{transform_indices = @transform_0, window_bounds = array<i64: 3, 32, 128>}, {pipeline_mode = #tpu.pipeline_mode<synchronous>, transform_indices = @transform_1, window_bounds = array<i64: 3, 128, 128>}, {pipeline_mode = #tpu.pipeline_mode<synchronous>, transform_indices = @transform_2, window_bounds = array<i64: 1, 128>}, {transform_indices = @transform_3, window_bounds = array<i64: 32, 128>}]} {
    %c0 = arith.constant 0 : index
    %c0_0 = arith.constant 0 : index
    %c0_1 = arith.constant 0 : index
    %0 = vector.load %arg1[%c0, %c0_0, %c0_1] : memref<3x32x128xf32, #tpu.memory_space<vmem>>, vector<1x32x128xf32>
    %1 = vector.shape_cast %0 : vector<1x32x128xf32> to vector<32x128xf32>
    %c0_2 = arith.constant 0 : index
    %c0_3 = arith.constant 0 : index
    %c0_4 = arith.constant 0 : index
    %2 = vector.load %arg2[%c0_2, %c0_3, %c0_4] : memref<3x128x128xf32, #tpu.memory_space<vmem>>, vector<1x128x128xf32>
    %3 = vector.shape_cast %2 : vector<1x128x128xf32> to vector<128x128xf32>
    %cst = arith.constant dense<0.000000e+00> : vector<32x128xf32>
    %4 = tpu.matmul %1, %3, %cst {dimension_numbers = #tpu.dot_dimension_numbers<[1], [0], [0], [1], [0, 0, 1, 1], [], []>} : vector<32x128xf32>, vector<128x128xf32>, vector<32x128xf32> -> vector<32x128xf32>
    %c1 = arith.constant 1 : index
    %c0_5 = arith.constant 0 : index
    %c0_6 = arith.constant 0 : index
    %5 = vector.load %arg1[%c1, %c0_5, %c0_6] : memref<3x32x128xf32, #tpu.memory_space<vmem>>, vector<1x32x128xf32>
    %6 = vector.shape_cast %5 : vector<1x32x128xf32> to vector<32x128xf32>
    %c1_7 = arith.constant 1 : index
    %c0_8 = arith.constant 0 : index
    %c0_9 = arith.constant 0 : index
    %7 = vector.load %arg2[%c1_7, %c0_8, %c0_9] : memref<3x128x128xf32, #tpu.memory_space<vmem>>, vector<1x128x128xf32>
    %8 = vector.shape_cast %7 : vector<1x128x128xf32> to vector<128x128xf32>
    %cst_10 = arith.constant dense<0.000000e+00> : vector<32x128xf32>
    %9 = tpu.matmul %6, %8, %cst_10 {dimension_numbers = #tpu.dot_dimension_numbers<[1], [0], [0], [1], [0, 0, 1, 1], [], []>} : vector<32x128xf32>, vector<128x128xf32>, vector<32x128xf32> -> vector<32x128xf32>
    %10 = arith.addf %4, %9 : vector<32x128xf32>
    %c2 = arith.constant 2 : index
    %c0_11 = arith.constant 0 : index
    %c0_12 = arith.constant 0 : index
    %11 = vector.load %arg1[%c2, %c0_11, %c0_12] : memref<3x32x128xf32, #tpu.memory_space<vmem>>, vector<1x32x128xf32>
    %12 = vector.shape_cast %11 : vector<1x32x128xf32> to vector<32x128xf32>
    %c2_13 = arith.constant 2 : index
    %c0_14 = arith.constant 0 : index
    %c0_15 = arith.constant 0 : index
    %13 = vector.load %arg2[%c2_13, %c0_14, %c0_15] : memref<3x128x128xf32, #tpu.memory_space<vmem>>, vector<1x128x128xf32>
    %14 = vector.shape_cast %13 : vector<1x128x128xf32> to vector<128x128xf32>
    %cst_16 = arith.constant dense<0.000000e+00> : vector<32x128xf32>
    %15 = tpu.matmul %12, %14, %cst_16 {dimension_numbers = #tpu.dot_dimension_numbers<[1], [0], [0], [1], [0, 0, 1, 1], [], []>} : vector<32x128xf32>, vector<128x128xf32>, vector<32x128xf32> -> vector<32x128xf32>
    %16 = arith.addf %10, %15 : vector<32x128xf32>
    %c0_17 = arith.constant 0 : index
    %c0_18 = arith.constant 0 : index
    %17 = vector.load %arg3[%c0_17, %c0_18] : memref<1x128xf32, #tpu.memory_space<vmem>>, vector<1x128xf32>
    %18 = vector.broadcast %17 : vector<1x128xf32> to vector<32x128xf32>
    %19 = arith.addf %16, %18 : vector<32x128xf32>
    %cst_19 = arith.constant 2.000000e-01 : f32
    %20 = vector.broadcast %cst_19 : f32 to vector<32x128xf32>
    %21 = arith.mulf %20, %19 : vector<32x128xf32>
    %22 = arith.maximumf %19, %21 : vector<32x128xf32>
    %c0_20 = arith.constant 0 : index
    %c0_21 = arith.constant 0 : index
    %23 = vector.load %arg4[%c0_20, %c0_21] : memref<32x128xf32, #tpu.memory_space<vmem>>, vector<32x128xf32>
    tpu.vector_store %arg4[%c0_20, %c0_21], %22 {strides = array<i32>} : memref<32x128xf32, #tpu.memory_space<vmem>>, vector<32x128xf32>,
    return
  }
  func.func @transform_0(%arg0: i32) -> (i32, i32, i32) {
    %c0_i32 = arith.constant 0 : i32
    %c0_i32_0 = arith.constant 0 : i32
    %c0_i32_1 = arith.constant 0 : i32
    return %c0_i32, %arg0, %c0_i32_0 : i32, i32, i32
  }
  func.func @transform_1(%arg0: i32) -> (i32, i32, i32) {
    %c0_i32 = arith.constant 0 : i32
    %c0_i32_0 = arith.constant 0 : i32
    %c0_i32_1 = arith.constant 0 : i32
    %c0_i32_2 = arith.constant 0 : i32
    return %c0_i32, %c0_i32_0, %c0_i32_1 : i32, i32, i32
  }
  func.func @transform_2(%arg0: i32) -> (i32, i32) {
    %c0_i32 = arith.constant 0 : i32
    %c0_i32_0 = arith.constant 0 : i32
    %c0_i32_1 = arith.constant 0 : i32
    return %c0_i32, %c0_i32_0 : i32, i32
  }
  func.func @transform_3(%arg0: i32) -> (i32, i32) {
    %c0_i32 = arith.constant 0 : i32
    %c0_i32_0 = arith.constant 0 : i32
    return %arg0, %c0_i32 : i32, i32
  }
}

</mosaic_0001>

<llo_original>
// kernel: tpu_custom_call.1
$region0: #{tpu_custom_call.1}
  #allocation0 [shape = 'u32[]', space=smem, size = 0x4, offset = 0x4, fixed_abs, tag = 'smem constant byte address 0x4 - core index']
  #allocation1 [shape = 'u32[144,128]{1,0:T(1,128)}', space=vmem, size = 0x12000, scoped, tag = 'internal scratch']
  %s0 = inlined_call_operand.hbm [shape: f32[3,32,128], index: 0, kind: input, shape index: {}]
  %s1 = inlined_call_operand.hbm [shape: f32[3,128,128], index: 1, kind: input, shape index: {}]
  %s2 = inlined_call_operand.vmem [shape: f32[1,128], index: 2, kind: input, shape index: {}]
  %s3 = inlined_call_operand.hbm [shape: f32[32,128], index: 3, kind: output, shape index: {}]
  %s4 = sld [smem:[#allocation0]]
  $region30: #{tpu_custom_call.1} parent=0
    _
  %s6 = ssub.s32 1, %s4
  %s7 = scalar_select 0, %s6, %s4
  $region1: #{tpu_custom_call.1} parent=0
    #allocation2 [shape = 'u8[49152]{0}', space=vmem, size = 0xc000, scoped, tag = 'input window, operand 0, single buffered']
    #allocation3 [shape = 's32[1]{0}', space=sflag, size = 0x4, scoped, tag = 'scoped memory for tpu_custom_call.1']
    #allocation4 [shape = 's32[1]{0}', space=sflag, size = 0x4, scoped, tag = 'scoped memory for tpu_custom_call.1']
    #allocation5 [shape = 'u8[196608]{0}', space=vmem, size = 0x30000, scoped, tag = 'input window, operand 1, single buffered']
    #allocation6 [shape = 's32[1]{0}', space=sflag, size = 0x4, scoped, tag = 'scoped memory for tpu_custom_call.1']
    #allocation7 [shape = 'u8[16384]{0}', space=vmem, size = 0x4000, scoped, tag = 'output window, operand 0, single buffered']
    %8 = vsyncpa [#allocation3], 0
    %9 = vsyncpa [#allocation6], 0
    %10 = vsyncpa [#allocation4], 0
    // Predicated region
    $region2: #{tpu_custom_call.1} parent=1 // pred_check
      _
    $region3: #{tpu_custom_call.1} parent=1 // pred_check_branch
      %12 = sbr.rel (0) target = $region5
    $region4: #{tpu_custom_call.1} parent=1 // pred_region
      %s14 = ssub.s32 1536, 1536
      %15 = vsyncadd [#allocation3], %s14
      %s16 = sshll.u32 [#allocation2], 4
      %s17 = int_to_ptr.vmem [resolvable:$true] %s16
      %22 = dma.hbm_to_vmem [thread:$0]  %s0, 1536, %s17, [#allocation3], 128, 128, 8
    $region5: #{tpu_custom_call.1} parent=1 // pred_fallthru
      _
    // Predicated region
    $region6: #{tpu_custom_call.1} parent=1 // pred_check
      _
    $region7: #{tpu_custom_call.1} parent=1 // pred_check_branch
      %24 = sbr.rel (0) target = $region9
    $region8: #{tpu_custom_call.1} parent=1 // pred_region
      %s26 = ssub.s32 6144, 6144
      %27 = vsyncadd [#allocation6], %s26
      %s28 = sshll.u32 [#allocation5], 4
      %s29 = int_to_ptr.vmem [resolvable:$true] %s28
      %34 = dma.hbm_to_vmem [thread:$0]  %s1, 6144, %s29, [#allocation6], 128, 128, 8
    $region9: #{tpu_custom_call.1} parent=1 // pred_fallthru
      _
    // Predicated region
    $region10: #{tpu_custom_call.1} parent=1 // pred_check
      _
    $region11: #{tpu_custom_call.1} parent=1 // pred_check_branch
      %36 = sbr.rel (0) target = $region13
    $region12: #{tpu_custom_call.1} parent=1 // pred_region
      _
    $region13: #{tpu_custom_call.1} parent=1 // pred_fallthru
      _
    // Predicated region
    $region14: #{tpu_custom_call.1} parent=1 // pred_check
      _
    $region15: #{tpu_custom_call.1} parent=1 // pred_check_branch
      %38 = sbr.rel (0) target = $region17
    $region16: #{tpu_custom_call.1} parent=1 // pred_region
      %39 = dma.done [#allocation3], 1536
    $region17: #{tpu_custom_call.1} parent=1 // pred_fallthru
      _
    // Predicated region
    $region18: #{tpu_custom_call.1} parent=1 // pred_check
      _
    $region19: #{tpu_custom_call.1} parent=1 // pred_check_branch
      %41 = sbr.rel (0) target = $region21
    $region20: #{tpu_custom_call.1} parent=1 // pred_region
      %42 = dma.done [#allocation6], 6144
    $region21: #{tpu_custom_call.1} parent=1 // pred_fallthru
      _
    %v43 = vld [vmem:[#allocation2] sm:$0xff]
    %v44 = vld [vmem:[#allocation2 + $0x8] sm:$0xff]
    %v45 = vld [vmem:[#allocation2 + $0x10] sm:$0xff]
    %v46 = vld [vmem:[#allocation2 + $0x18] sm:$0xff]
    %v47 = vld [vmem:[#allocation5] sm:$0xff]
    %v48 = vld [vmem:[#allocation5 + $0x8] sm:$0xff]
    %v49 = vld [vmem:[#allocation5 + $0x10] sm:$0xff]
    %v50 = vld [vmem:[#allocation5 + $0x18] sm:$0xff]
    %v51 = vld [vmem:[#allocation5 + $0x20] sm:$0xff]
    %v52 = vld [vmem:[#allocation5 + $0x28] sm:$0xff]
    %v53 = vld [vmem:[#allocation5 + $0x30] sm:$0xff]
    %v54 = vld [vmem:[#allocation5 + $0x38] sm:$0xff]
    %v55 = vld [vmem:[#allocation5 + $0x40] sm:$0xff]
    %v56 = vld [vmem:[#allocation5 + $0x48] sm:$0xff]
    %v57 = vld [vmem:[#allocation5 + $0x50] sm:$0xff]
    %v58 = vld [vmem:[#allocation5 + $0x58] sm:$0xff]
    %v59 = vld [vmem:[#allocation5 + $0x60] sm:$0xff]
    %v60 = vld [vmem:[#allocation5 + $0x68] sm:$0xff]
    %v61 = vld [vmem:[#allocation5 + $0x70] sm:$0xff]
    %v62 = vld [vmem:[#allocation5 + $0x78] sm:$0xff]
    %s63 = scalar_lea.vmem [#allocation2], 32
    %v64 = vld [vmem:[%s63] sm:$0xff]
    %v65 = vld [vmem:[%s63 + $0x8] sm:$0xff]
    %v66 = vld [vmem:[%s63 + $0x10] sm:$0xff]
    %v67 = vld [vmem:[%s63 + $0x18] sm:$0xff]
    %s68 = scalar_lea.vmem [#allocation5], 128
    %v69 = vld [vmem:[%s68] sm:$0xff]
    %v70 = vld [vmem:[%s68 + $0x8] sm:$0xff]
    %v71 = vld [vmem:[%s68 + $0x10] sm:$0xff]
    %v72 = vld [vmem:[%s68 + $0x18] sm:$0xff]
    %v73 = vld [vmem:[%s68 + $0x20] sm:$0xff]
    %v74 = vld [vmem:[%s68 + $0x28] sm:$0xff]
    %v75 = vld [vmem:[%s68 + $0x30] sm:$0xff]
    %v76 = vld [vmem:[%s68 + $0x38] sm:$0xff]
    %v77 = vld [vmem:[%s68 + $0x40] sm:$0xff]
    %v78 = vld [vmem:[%s68 + $0x48] sm:$0xff]
    %v79 = vld [vmem:[%s68 + $0x50] sm:$0xff]
    %v80 = vld [vmem:[%s68 + $0x58] sm:$0xff]
    %v81 = vld [vmem:[%s68 + $0x60] sm:$0xff]
    %v82 = vld [vmem:[%s68 + $0x68] sm:$0xff]
    %v83 = vld [vmem:[%s68 + $0x70] sm:$0xff]
    %v84 = vld [vmem:[%s68 + $0x78] sm:$0xff]
    %85 = vmatprep.subr.mxu0 0.0
    %86 = vmatpush1.msra.mxu0 %v69
    %87 = vmatprep.subr.mxu0 0.0
    %88 = vmatpush1.msra.mxu0 %v70
    %89 = vmatprep.subr.mxu0 0.0
    %90 = vmatpush1.msra.mxu0 %v71
    %91 = vmatprep.subr.mxu0 0.0
    %92 = vmatpush1.msra.mxu0 %v72
    %93 = vmatprep.subr.mxu0 0.0
    %94 = vmatpush1.msra.mxu0 %v73
    %95 = vmatprep.subr.mxu0 0.0
    %96 = vmatpush1.msra.mxu0 %v74
    %97 = vmatprep.subr.mxu0 0.0
    %98 = vmatpush1.msra.mxu0 %v75
    %99 = vmatprep.subr.mxu0 0.0
    %100 = vmatpush1.msra.mxu0 %v76
    %101 = vmatprep.subr.mxu0 0.0
    %102 = vmatpush1.msra.mxu0 %v77
    %103 = vmatprep.subr.mxu0 0.0
    %104 = vmatpush1.msra.mxu0 %v78
    %105 = vmatprep.subr.mxu0 0.0
    %106 = vmatpush1.msra.mxu0 %v79
    %107 = vmatprep.subr.mxu0 0.0
    %108 = vmatpush1.msra.mxu0 %v80
    %109 = vmatprep.subr.mxu0 0.0
    %110 = vmatpush1.msra.mxu0 %v81
    %111 = vmatprep.subr.mxu0 0.0
    %112 = vmatpush1.msra.mxu0 %v82
    %113 = vmatprep.subr.mxu0 0.0
    %114 = vmatpush1.msra.mxu0 %v83
    %115 = vmatprep.subr.mxu0 0.0
    %116 = vmatpush1.msra.mxu0 %v84
    %117 = vmatprep.subr.mxu0 0.0
    %118 = vmatpush1.msra.mxu0 0.0
    %119 = vmatprep.subr.mxu0 0.0
    %120 = vmatpush1.msra.mxu0 0.0
    %121 = vmatprep.subr.mxu0 0.0
    %122 = vmatpush1.msra.mxu0 0.0
    %123 = vmatprep.subr.mxu0 0.0
    %124 = vmatpush1.msra.mxu0 0.0
    %125 = vmatprep.subr.mxu0 0.0
    %126 = vmatpush1.msra.mxu0 0.0
    %127 = vmatprep.subr.mxu0 0.0
    %128 = vmatpush1.msra.mxu0 0.0
    %129 = vmatprep.subr.mxu0 0.0
    %130 = vmatpush1.msra.mxu0 0.0
    %131 = vmatprep.subr.mxu0 0.0
    %132 = vmatpush1.msra.mxu0 0.0
    %133 = vmatprep.subr.mxu0 0.0
    %134 = vmatpush1.msra.mxu0 0.0
    %135 = vmatprep.subr.mxu0 0.0
    %136 = vmatpush1.msra.mxu0 0.0
    %137 = vmatprep.subr.mxu0 0.0
    %138 = vmatpush1.msra.mxu0 0.0
    %139 = vmatprep.subr.mxu0 0.0
    %140 = vmatpush1.msra.mxu0 0.0
    %141 = vmatprep.subr.mxu0 0.0
    %142 = vmatpush1.msra.mxu0 0.0
    %143 = vmatprep.subr.mxu0 0.0
    %144 = vmatpush1.msra.mxu0 0.0
    %145 = vmatprep.subr.mxu0 0.0
    %146 = vmatpush1.msra.mxu0 0.0
    %147 = vmatprep.subr.mxu0 0.0
    %148 = vmatpush1.msra.mxu0 0.0
    %149 = vmatprep.mubr.f32.mxu0 0.0
    %150 = vmatmul.mubr.f32.gmra.mrb[0].mxu0 %v64
    %v151 = vpop.f32.mrb[0].mxu0
    %v152 = vadd.f32 0.0, %v151
    %v153 = vpop.f32.mrb[0].mxu0
    %154 = vmatprep.mubr.f32.mxu0 0.0
    %155 = vmatmul.mubr.f32.gmra.mrb[0].mxu0 %v65
    %v156 = vpop.f32.mrb[0].mxu0
    %v157 = vadd.f32 0.0, %v156
    %v158 = vpop.f32.mrb[0].mxu0
    %159 = vmatprep.mubr.f32.mxu0 0.0
    %160 = vmatmul.mubr.f32.gmra.mrb[0].mxu0 %v66
    %v161 = vpop.f32.mrb[0].mxu0
    %v162 = vadd.f32 0.0, %v161
    %v163 = vpop.f32.mrb[0].mxu0
    %164 = vmatprep.mubr.f32.mxu0 0.0
    %165 = vmatmul.mubr.f32.gmra.mrb[0].mxu0 %v67
    %v166 = vpop.f32.mrb[0].mxu0
    %v167 = vadd.f32 0.0, %v166
    %v168 = vpop.f32.mrb[0].mxu0
    %169 = vdwg.mxu0
    %170 = vmatprep.subr.mxu0 0.0
    %171 = vmatpush1.msra.mxu0 %v47
    %172 = vmatprep.subr.mxu0 0.0
    %173 = vmatpush1.msra.mxu0 %v48
    %174 = vmatprep.subr.mxu0 0.0
    %175 = vmatpush1.msra.mxu0 %v49
    %176 = vmatprep.subr.mxu0 0.0
    %177 = vmatpush1.msra.mxu0 %v50
    %178 = vmatprep.subr.mxu0 0.0
    %179 = vmatpush1.msra.mxu0 %v51
    %180 = vmatprep.subr.mxu0 0.0
    %181 = vmatpush1.msra.mxu0 %v52
    %182 = vmatprep.subr.mxu0 0.0
    %183 = vmatpush1.msra.mxu0 %v53
    %184 = vmatprep.subr.mxu0 0.0
    %185 = vmatpush1.msra.mxu0 %v54
    %186 = vmatprep.subr.mxu0 0.0
    %187 = vmatpush1.msra.mxu0 %v55
    %188 = vmatprep.subr.mxu0 0.0
    %189 = vmatpush1.msra.mxu0 %v56
    %190 = vmatprep.subr.mxu0 0.0
    %191 = vmatpush1.msra.mxu0 %v57
    %192 = vmatprep.subr.mxu0 0.0
    %193 = vmatpush1.msra.mxu0 %v58
    %194 = vmatprep.subr.mxu0 0.0
    %195 = vmatpush1.msra.mxu0 %v59
    %196 = vmatprep.subr.mxu0 0.0
    %197 = vmatpush1.msra.mxu0 %v60
    %198 = vmatprep.subr.mxu0 0.0
    %199 = vmatpush1.msra.mxu0 %v61
    %200 = vmatprep.subr.mxu0 0.0
    %201 = vmatpush1.msra.mxu0 %v62
    %202 = vmatprep.subr.mxu0 0.0
    %203 = vmatpush1.msra.mxu0 0.0
    %204 = vmatprep.subr.mxu0 0.0
    %205 = vmatpush1.msra.mxu0 0.0
    %206 = vmatprep.subr.mxu0 0.0
    %207 = vmatpush1.msra.mxu0 0.0
    %208 = vmatprep.subr.mxu0 0.0
    %209 = vmatpush1.msra.mxu0 0.0
    %210 = vmatprep.subr.mxu0 0.0
    %211 = vmatpush1.msra.mxu0 0.0
    %212 = vmatprep.subr.mxu0 0.0
    %213 = vmatpush1.msra.mxu0 0.0
    %214 = vmatprep.subr.mxu0 0.0
    %215 = vmatpush1.msra.mxu0 0.0
    %216 = vmatprep.subr.mxu0 0.0
    %217 = vmatpush1.msra.mxu0 0.0
    %218 = vmatprep.subr.mxu0 0.0
    %219 = vmatpush1.msra.mxu0 0.0
    %220 = vmatprep.subr.mxu0 0.0
    %221 = vmatpush1.msra.mxu0 0.0
    %222 = vmatprep.subr.mxu0 0.0
    %223 = vmatpush1.msra.mxu0 0.0
    %224 = vmatprep.subr.mxu0 0.0
    %225 = vmatpush1.msra.mxu0 0.0
    %226 = vmatprep.subr.mxu0 0.0
    %227 = vmatpush1.msra.mxu0 0.0
    %228 = vmatprep.subr.mxu0 0.0
    %229 = vmatpush1.msra.mxu0 0.0
    %230 = vmatprep.subr.mxu0 0.0
    %231 = vmatpush1.msra.mxu0 0.0
    %232 = vmatprep.subr.mxu0 0.0
    %233 = vmatpush1.msra.mxu0 0.0
    %234 = vmatprep.mubr.f32.mxu0 0.0
    %235 = vmatmul.mubr.f32.gmra.mrb[0].mxu0 %v43
    %v236 = vpop.f32.mrb[0].mxu0
    %v237 = vadd.f32 %v152, %v236
    %v238 = vpop.f32.mrb[0].mxu0
    %239 = vmatprep.mubr.f32.mxu0 0.0
    %240 = vmatmul.mubr.f32.gmra.mrb[0].mxu0 %v44
    %v241 = vpop.f32.mrb[0].mxu0
    %v242 = vadd.f32 %v157, %v241
    %v243 = vpop.f32.mrb[0].mxu0
    %244 = vmatprep.mubr.f32.mxu0 0.0
    %245 = vmatmul.mubr.f32.gmra.mrb[0].mxu0 %v45
    %v246 = vpop.f32.mrb[0].mxu0
    %v247 = vadd.f32 %v162, %v246
    %v248 = vpop.f32.mrb[0].mxu0
    %249 = vmatprep.mubr.f32.mxu0 0.0
    %250 = vmatmul.mubr.f32.gmra.mrb[0].mxu0 %v46
    %v251 = vpop.f32.mrb[0].mxu0
    %v252 = vadd.f32 %v167, %v251
    %v253 = vpop.f32.mrb[0].mxu0
    %254 = vdwg.mxu0
    %s255 = scalar_lea.vmem [#allocation2], 64
    %v256 = vld [vmem:[%s255] sm:$0xff]
    %v257 = vld [vmem:[%s255 + $0x8] sm:$0xff]
    %v258 = vld [vmem:[%s255 + $0x10] sm:$0xff]
    %v259 = vld [vmem:[%s255 + $0x18] sm:$0xff]
    %s260 = scalar_lea.vmem [#allocation5], 256
    %v261 = vld [vmem:[%s260] sm:$0xff]
    %v262 = vld [vmem:[%s260 + $0x8] sm:$0xff]
    %v263 = vld [vmem:[%s260 + $0x10] sm:$0xff]
    %v264 = vld [vmem:[%s260 + $0x18] sm:$0xff]
    %v265 = vld [vmem:[%s260 + $0x20] sm:$0xff]
    %v266 = vld [vmem:[%s260 + $0x28] sm:$0xff]
    %v267 = vld [vmem:[%s260 + $0x30] sm:$0xff]
    %v268 = vld [vmem:[%s260 + $0x38] sm:$0xff]
    %v269 = vld [vmem:[%s260 + $0x40] sm:$0xff]
    %v270 = vld [vmem:[%s260 + $0x48] sm:$0xff]
    %v271 = vld [vmem:[%s260 + $0x50] sm:$0xff]
    %v272 = vld [vmem:[%s260 + $0x58] sm:$0xff]
    %v273 = vld [vmem:[%s260 + $0x60] sm:$0xff]
    %v274 = vld [vmem:[%s260 + $0x68] sm:$0xff]
    %v275 = vld [vmem:[%s260 + $0x70] sm:$0xff]
    %v276 = vld [vmem:[%s260 + $0x78] sm:$0xff]
    %277 = vmatprep.subr.mxu0 0.0
    %278 = vmatpush1.msra.mxu0 %v261
    %279 = vmatprep.subr.mxu0 0.0
    %280 = vmatpush1.msra.mxu0 %v262
    %281 = vmatprep.subr.mxu0 0.0
    %282 = vmatpush1.msra.mxu0 %v263
    %283 = vmatprep.subr.mxu0 0.0
    %284 = vmatpush1.msra.mxu0 %v264
    %285 = vmatprep.subr.mxu0 0.0
    %286 = vmatpush1.msra.mxu0 %v265
    %287 = vmatprep.subr.mxu0 0.0
    %288 = vmatpush1.msra.mxu0 %v266
    %289 = vmatprep.subr.mxu0 0.0
    %290 = vmatpush1.msra.mxu0 %v267
    %291 = vmatprep.subr.mxu0 0.0
    %292 = vmatpush1.msra.mxu0 %v268
    %293 = vmatprep.subr.mxu0 0.0
    %294 = vmatpush1.msra.mxu0 %v269
    %295 = vmatprep.subr.mxu0 0.0
    %296 = vmatpush1.msra.mxu0 %v270
    %297 = vmatprep.subr.mxu0 0.0
    %298 = vmatpush1.msra.mxu0 %v271
    %299 = vmatprep.subr.mxu0 0.0
    %300 = vmatpush1.msra.mxu0 %v272
    %301 = vmatprep.subr.mxu0 0.0
    %302 = vmatpush1.msra.mxu0 %v273
    %303 = vmatprep.subr.mxu0 0.0
    %304 = vmatpush1.msra.mxu0 %v274
    %305 = vmatprep.subr.mxu0 0.0
    %306 = vmatpush1.msra.mxu0 %v275
    %307 = vmatprep.subr.mxu0 0.0
    %308 = vmatpush1.msra.mxu0 %v276
    %309 = vmatprep.subr.mxu0 0.0
    %310 = vmatpush1.msra.mxu0 0.0
    %311 = vmatprep.subr.mxu0 0.0
    %312 = vmatpush1.msra.mxu0 0.0
    %313 = vmatprep.subr.mxu0 0.0
    %314 = vmatpush1.msra.mxu0 0.0
    %315 = vmatprep.subr.mxu0 0.0
    %316 = vmatpush1.msra.mxu0 0.0
    %317 = vmatprep.subr.mxu0 0.0
    %318 = vmatpush1.msra.mxu0 0.0
    %319 = vmatprep.subr.mxu0 0.0
    %320 = vmatpush1.msra.mxu0 0.0
    %321 = vmatprep.subr.mxu0 0.0
    %322 = vmatpush1.msra.mxu0 0.0
    %323 = vmatprep.subr.mxu0 0.0
    %324 = vmatpush1.msra.mxu0 0.0
    %325 = vmatprep.subr.mxu0 0.0
    %326 = vmatpush1.msra.mxu0 0.0
    %327 = vmatprep.subr.mxu0 0.0
    %328 = vmatpush1.msra.mxu0 0.0
    %329 = vmatprep.subr.mxu0 0.0
    %330 = vmatpush1.msra.mxu0 0.0
    %331 = vmatprep.subr.mxu0 0.0
    %332 = vmatpush1.msra.mxu0 0.0
    %333 = vmatprep.subr.mxu0 0.0
    %334 = vmatpush1.msra.mxu0 0.0
    %335 = vmatprep.subr.mxu0 0.0
    %336 = vmatpush1.msra.mxu0 0.0
    %337 = vmatprep.subr.mxu0 0.0
    %338 = vmatpush1.msra.mxu0 0.0
    %339 = vmatprep.subr.mxu0 0.0
    %340 = vmatpush1.msra.mxu0 0.0
    %341 = vmatprep.mubr.f32.mxu0 0.0
    %342 = vmatmul.mubr.f32.gmra.mrb[0].mxu0 %v256
    %v343 = vpop.f32.mrb[0].mxu0
    %v344 = vadd.f32 0.0, %v343
    %v345 = vpop.f32.mrb[0].mxu0
    %346 = vmatprep.mubr.f32.mxu0 0.0
    %347 = vmatmul.mubr.f32.gmra.mrb[0].mxu0 %v257
    %v348 = vpop.f32.mrb[0].mxu0
    %v349 = vadd.f32 0.0, %v348
    %v350 = vpop.f32.mrb[0].mxu0
    %351 = vmatprep.mubr.f32.mxu0 0.0
    %352 = vmatmul.mubr.f32.gmra.mrb[0].mxu0 %v258
    %v353 = vpop.f32.mrb[0].mxu0
    %v354 = vadd.f32 0.0, %v353
    %v355 = vpop.f32.mrb[0].mxu0
    %356 = vmatprep.mubr.f32.mxu0 0.0
    %357 = vmatmul.mubr.f32.gmra.mrb[0].mxu0 %v259
    %v358 = vpop.f32.mrb[0].mxu0
    %v359 = vadd.f32 0.0, %v358
    %v360 = vpop.f32.mrb[0].mxu0
    %361 = vdwg.mxu0
    %v362 = vadd.f32 %v237, %v344
    %v363 = vadd.f32 %v242, %v349
    %v364 = vadd.f32 %v247, %v354
    %v365 = vadd.f32 %v252, %v359
    %v366 = vld [vmem:[%s2] sm:$0x1]
    %v368 = vlaneseq
    %v369 = vshrl.u32 %v368, 7
    %v370 = vsub.s32 0, %v369
    %v371 = vrot.slane %v366, %v370
    %v373 = vadd.f32 %v362, %v371
    %v374 = vadd.f32 %v363, %v371
    %v375 = vadd.f32 %v364, %v371
    %v376 = vadd.f32 %v365, %v371
    %v377 = vmul.f32 %v373, 0.2
    %v378 = vmul.f32 %v374, 0.2
    %v379 = vmul.f32 %v375, 0.2
    %v380 = vmul.f32 %v376, 0.2
    %v381 = vmax.f32 %v373, %v377
    %v382 = vmax.f32 %v374, %v378
    %v383 = vmax.f32 %v375, %v379
    %v384 = vmax.f32 %v376, %v380
    %385 = vst [vmem:[#allocation7] sm:$0xff] %v381
    %386 = vst [vmem:[#allocation7 + $0x8] sm:$0xff] %v382
    %387 = vst [vmem:[#allocation7 + $0x10] sm:$0xff] %v383
    %388 = vst [vmem:[#allocation7 + $0x18] sm:$0xff] %v384
    // Predicated region
    $region22: #{tpu_custom_call.1} parent=1 // pred_check
      _
    $region23: #{tpu_custom_call.1} parent=1 // pred_check_branch
      %390 = sbr.rel (0) target = $region25
    $region24: #{tpu_custom_call.1} parent=1 // pred_region
      %s392 = ssub.s32 512, 512
      %393 = vsyncadd [#allocation4], %s392
      %s394 = sshll.u32 [#allocation7], 4
      %s395 = int_to_ptr.vmem [resolvable:$true] %s394
      %400 = dma.vmem_to_hbm [thread:$0]  %s395, 512, %s3, [#allocation4], 128, 128, 8
    $region25: #{tpu_custom_call.1} parent=1 // pred_fallthru
      _
    // Predicated region
    $region26: #{tpu_custom_call.1} parent=1 // pred_check
      _
    $region27: #{tpu_custom_call.1} parent=1 // pred_check_branch
      %402 = sbr.rel (0) target = $region29
    $region28: #{tpu_custom_call.1} parent=1 // pred_region
      %403 = dma.done [#allocation4], 512
    $region29: #{tpu_custom_call.1} parent=1 // pred_fallthru
      _
    %404 = vsyncpa [#allocation3], 1
    %405 = vsyncpa [#allocation6], 1
    %406 = vsyncpa [#allocation4], 1

</llo_original>
